<compile_context>
chip_gen: v6e
topology: v6e:2x2x1
jax: 0.10.0
libtpu: 0.0.40
codegen_flags: <defaults>
</compile_context>

<pallas_src>
import functools

import jax
import jax.numpy as jnp
from jax.experimental import pallas as pl
from jax.experimental.pallas import tpu as pltpu


def _round_up(x, m):
    return (x + m - 1) // m * m


def _pad2d(a, rows, cols, dtype):
    """Cast to dtype and zero-pad a 2-D array up to (rows, cols).

    No-op (under jit) when the array already has the target shape/dtype, so
    pre-prepared weights pay no per-call cast/pad HBM traffic.
    """
    a = a.astype(dtype)
    r, c = a.shape
    if r == rows and c == cols:
        return a
    return jnp.zeros((rows, cols), dtype).at[:r, :c].set(a)


@functools.lru_cache(maxsize=None)
def _vmem_capacity_bytes():
    """Per-TensorCore VMEM capacity; conservative 64 MiB fallback (v7x)."""
    try:
        cap = int(pltpu.get_tpu_info().vmem_capacity_bytes)
        if cap > 0:
            return cap
    except Exception:
        pass
    return 64 << 20


def _tile_plan(M, model_dim, ffn_dim, c_isz, o_isz, tm, tf):
    """Pick (tm, tf) tiles + padded dims from the chip's VMEM budget."""
    cap = _vmem_capacity_bytes()
    budget = max(cap - (16 << 20), 24 << 20)  # headroom for compiler scratch

    md_p = _round_up(model_dim, 128)
    fd_min = _round_up(ffn_dim, 128)
    if tf is None:
        tf_eff = min(512, fd_min)
    else:
        tf_eff = min(_round_up(tf, 128), fd_min)
    fd_p = _round_up(ffn_dim, tf_eff)

    def need(tm_, tf_):
        dbuf = 2 * (tm_ * md_p * c_isz        # x tile
                    + md_p * tf_ * c_isz      # w1 slab
                    + tf_ * md_p * c_isz      # w2 slab
                    + tm_ * md_p * o_isz      # output tile (double-buffered)
                    + tf_ * 4 + md_p * 4)     # b1 / b2 slabs (f32)
        acc = 0 if o_isz == 4 else tm_ * md_p * 4  # separate f32 accumulator
        h = tm_ * tf_ * 4                          # (tm, tf) f32 intermediate
        return dbuf + acc + h

    # If even the smallest row tile can't fit, shrink tf (weight HBM traffic
    # is independent of tf, so this is bandwidth-free).
    if tf is None:
        while tf_eff > 128 and need(8, tf_eff) > budget:
            tf_eff = max(128, _round_up(tf_eff // 2, 128))
        fd_p = _round_up(ffn_dim, tf_eff)

    tm_cap = _round_up(max(M, 8), 8)
    if tm is not None:
        tm_eff = max(8, min(_round_up(tm, 8), tm_cap))
    else:
        tm_eff = 8
        for cand in (1024, 896, 768, 640, 512, 384, 256, 192, 128, 64, 32, 16, 8):
            c = min(cand, tm_cap)
            if need(c, tf_eff) <= budget:
                tm_eff = c
                break
        # Keep >= 2 row tiles when there is real work so the "parallel" row
        # axis shards across both TensorCores on multi-core parts (v7x).
        if tm_eff >= M and M > 256:
            tm_eff = _round_up((M + 1) // 2, 8)

    Mp = _round_up(max(M, 1), tm_eff)

    vmem_limit = need(tm_eff, tf_eff) + (8 << 20)
    vmem_limit = max(vmem_limit, 32 << 20)
    vmem_limit = min(vmem_limit, cap - (2 << 20))  # never exceed physical VMEM
    return tm_eff, Mp, tf_eff, fd_p, md_p, int(vmem_limit)


def _ffn_kernel_acc(x_ref, w1_ref, b1_ref, w2_ref, b2_ref, o_ref, acc_ref):
    """General path: f32 accumulator scratch, cast to o_ref dtype at the end."""
    k = pl.program_id(1)

    @pl.when(k == 0)
    def _init():
        acc_ref[...] = jnp.zeros_like(acc_ref)

    h = jnp.dot(x_ref[...], w1_ref[...], preferred_element_type=jnp.float32)
    h = jnp.maximum(h + b1_ref[...], 0.0)
    acc_ref[...] += jnp.dot(h.astype(w2_ref.dtype), w2_ref[...],
                            preferred_element_type=jnp.float32)

    @pl.when(k == pl.num_programs(1) - 1)
    def _finalize():
        o_ref[...] = (acc_ref[...] + b2_ref[...]).astype(o_ref.dtype)


def _ffn_kernel_f32out(x_ref, w1_ref, b1_ref, w2_ref, b2_ref, o_ref):
    """f32-output path: accumulate straight into the resident output block."""
    k = pl.program_id(1)

    @pl.when(k == 0)
    def _init():
        o_ref[...] = jnp.zeros_like(o_ref)

    h = jnp.dot(x_ref[...], w1_ref[...], preferred_element_type=jnp.float32)
    h = jnp.maximum(h + b1_ref[...], 0.0)
    o_ref[...] += jnp.dot(h.astype(w2_ref.dtype), w2_ref[...],
                          preferred_element_type=jnp.float32)

    @pl.when(k == pl.num_programs(1) - 1)
    def _finalize():
        o_ref[...] += b2_ref[...]


def pad_ffn_weights(w1, b1, w2, b2, *, tf=None, compute_dtype=jnp.bfloat16):
    """One-time weight preparation (cast + pad to tile-friendly shapes).

    Pass the results to feed_forward_layer (same tf / compute_dtype) so the
    per-call path does no weight cast/pad HBM traffic.
    """
    model_dim, ffn_dim = w1.shape
    cdt = jnp.dtype(compute_dtype)
    md_p = _round_up(model_dim, 128)
    fd_min = _round_up(ffn_dim, 128)
    tf_eff = min(512, fd_min) if tf is None else min(_round_up(tf, 128), fd_min)
    fd_p = _round_up(ffn_dim, tf_eff)
    return (_pad2d(w1, md_p, fd_p, cdt),
            _pad2d(b1.reshape(1, -1), 1, fd_p, jnp.float32),
            _pad2d(w2, fd_p, md_p, cdt),
            _pad2d(b2.reshape(1, -1), 1, md_p, jnp.float32))


@functools.partial(jax.jit, static_argnames=("tm", "tf", "compute_dtype"))
def feed_forward_layer(x, w1, b1, w2, b2, *, tm=None, tf=None,
                       compute_dtype=jnp.bfloat16):
    """y = relu(x @ w1 + b1) @ w2 + b2.

    x: (batch, seq, model_dim).  w1/w2 may be raw (model_dim, ffn_dim) /
    (ffn_dim, model_dim) arrays or the padded/cast arrays from pad_ffn_weights.
    Output has the dtype of x.
    """
    batch, seq, model_dim = x.shape
    ffn_dim = w1.shape[1]
    out_dtype = jnp.dtype(x.dtype)
    cdt = jnp.dtype(compute_dtype) if compute_dtype is not None else out_dtype
    M = batch * seq

    tm_eff, Mp, tf_eff, fd_p, md_p, vmem_limit = _tile_plan(
        M, model_dim, ffn_dim, cdt.itemsize, out_dtype.itemsize, tm, tf)

    # Activations are cast/padded per call (they change every call); weights
    # are a no-op here when pre-prepared with pad_ffn_weights.
    x2 = _pad2d(x.reshape(M, model_dim), Mp, md_p, cdt)
    w1p = _pad2d(w1, md_p, fd_p, cdt)
    w2p = _pad2d(w2, fd_p, md_p, cdt)
    b1p = _pad2d(b1.reshape(1, -1), 1, fd_p, jnp.float32)
    b2p = _pad2d(b2.reshape(1, -1), 1, md_p, jnp.float32)

    n_row_tiles = Mp // tm_eff
    grid = (n_row_tiles, fd_p // tf_eff)

    f32_out = out_dtype == jnp.float32
    kernel = _ffn_kernel_f32out if f32_out else _ffn_kernel_acc
    scratch = [] if f32_out else [pltpu.VMEM((tm_eff, md_p), jnp.float32)]

    cost = pl.CostEstimate(
        flops=4 * Mp * md_p * fd_p,  # two MXU matmuls
        transcendentals=0,
        bytes_accessed=int(
            Mp * md_p * cdt.itemsize                         # x read once
            + n_row_tiles * 2 * md_p * fd_p * cdt.itemsize   # w1+w2 per row tile
            + n_row_tiles * (fd_p + md_p) * 4                # biases
            + Mp * md_p * out_dtype.itemsize),               # output
    )

    out2 = pl.pallas_call(
        kernel,
        out_shape=jax.ShapeDtypeStruct((Mp, md_p), out_dtype),
        grid_spec=pltpu.PrefetchScalarGridSpec(
            num_scalar_prefetch=0,
            grid=grid,
            in_specs=[
                pl.BlockSpec((tm_eff, md_p), lambda i, k: (i, 0)),  # x rows (resident over k)
                pl.BlockSpec((md_p, tf_eff), lambda i, k: (0, k)),  # w1 k-slab
                pl.BlockSpec((1, tf_eff), lambda i, k: (0, k)),     # b1 k-slab
                pl.BlockSpec((tf_eff, md_p), lambda i, k: (k, 0)),  # w2 k-slab
                pl.BlockSpec((1, md_p), lambda i, k: (0, 0)),       # b2
            ],
            out_specs=pl.BlockSpec((tm_eff, md_p), lambda i, k: (i, 0)),
            scratch_shapes=scratch,
        ),
        compiler_params=pltpu.CompilerParams(
            dimension_semantics=("parallel", "arbitrary"),
            vmem_limit_bytes=vmem_limit,
        ),
        cost_estimate=cost,
    )(x2, w1p, b1p, w2p, b2p)

    return out2[:M, :model_dim].reshape(batch, seq, model_dim)


if __name__ == "__main__":
    # Small shapes consistent with the module: (batch, seq, model_dim)
    batch, seq, model_dim, ffn_dim = 2, 8, 32, 64

    key = jax.random.PRNGKey(0)
    kx, kw1, kb1, kw2, kb2 = jax.random.split(key, 5)

    x = jax.random.normal(kx, (batch, seq, model_dim), dtype=jnp.float32)
    # nn.Linear(model_dim, ffn_dim).weight is (ffn_dim, model_dim); stored transposed.
    w1 = jax.random.normal(kw1, (model_dim, ffn_dim), dtype=jnp.float32) * 0.1
    b1 = jax.random.normal(kb1, (ffn_dim,), dtype=jnp.float32) * 0.1
    w2 = jax.random.normal(kw2, (ffn_dim, model_dim), dtype=jnp.float32) * 0.1
    b2 = jax.random.normal(kb2, (model_dim,), dtype=jnp.float32) * 0.1

    # Pure-JAX reference.
    ref = jnp.maximum(x @ w1 + b1, 0.0) @ w2 + b2

    # 1) Exact-precision path (f32 matmuls, accumulate in the output block).
    out_f32 = jax.block_until_ready(
        feed_forward_layer(x, w1, b1, w2, b2, compute_dtype=jnp.float32))
    assert out_f32.shape == (batch, seq, model_dim)
    assert jnp.allclose(out_f32, ref, atol=1e-5, rtol=1e-5)

    # 2) Default fast path (bf16 MXU operands, f32 accumulation).
    out_bf = jax.block_until_ready(feed_forward_layer(x, w1, b1, w2, b2))
    assert out_bf.shape == (batch, seq, model_dim)
    assert jnp.allclose(out_bf, ref, atol=3e-2, rtol=3e-2)

    # 3) Pre-prepared weights (no per-call cast/pad inside the layer).
    w1p, b1p, w2p, b2p = pad_ffn_weights(w1, b1, w2, b2)
    out_prep = jax.block_until_ready(feed_forward_layer(x, w1p, b1p, w2p, b2p))
    assert jnp.allclose(out_prep, ref, atol=3e-2, rtol=3e-2)

    # 4) Narrow (bf16) output dtype exercises the separate-accumulator kernel.
    out_nb = jax.block_until_ready(
        feed_forward_layer(x.astype(jnp.bfloat16), w1p, b1p, w2p, b2p))
    assert out_nb.dtype == jnp.bfloat16
    assert jnp.allclose(out_nb.astype(jnp.float32), ref, atol=1e-1, rtol=1e-1)

    print("KERNEL_OK")
</pallas_src>

<mosaic_0001>
module attributes {stable_mosaic.version = 11 : i64} {
  func.func @_ffn_kernel_f32out(%arg0: i32, %arg1: i32, %arg2: memref<16x128xf32, #tpu.memory_space<vmem>>, %arg3: memref<128x128xf32, #tpu.memory_space<vmem>>, %arg4: memref<1x128xf32, #tpu.memory_space<vmem>>, %arg5: memref<128x128xf32, #tpu.memory_space<vmem>>, %arg6: memref<1x128xf32, #tpu.memory_space<vmem>>, %arg7: memref<16x128xf32, #tpu.memory_space<vmem>>) attributes {dimension_semantics = [#tpu.dimension_semantics<parallel>, #tpu.dimension_semantics<arbitrary>], iteration_bounds = array<i64: 1, 1>, scalar_prefetch = 0 : i64, scratch_operands = 0 : i64, tpu.core_type = #tpu.core_type<tc>, window_params = [{transform_indices = @transform_0, window_bounds = array<i64: 16, 128>}, {transform_indices = @transform_1, window_bounds = array<i64: 128, 128>}, {transform_indices = @transform_2, window_bounds = array<i64: 1, 128>}, {transform_indices = @transform_3, window_bounds = array<i64: 128, 128>}, {pipeline_mode = #tpu.pipeline_mode<synchronous>, transform_indices = @transform_4, window_bounds = array<i64: 1, 128>}, {transform_indices = @transform_5, window_bounds = array<i64: 16, 128>}]} {
    %c0_i32 = arith.constant 0 : i32
    %0 = arith.cmpi eq, %arg1, %c0_i32 : i32
    %1 = arith.extui %0 : i1 to i32
    %c0_i32_0 = arith.constant 0 : i32
    %2 = arith.cmpi ne, %1, %c0_i32_0 : i32
    scf.if %2 {
      %cst_16 = arith.constant 0.000000e+00 : f32
      %19 = vector.broadcast %cst_16 : f32 to vector<16x128xf32>
      %c0_17 = arith.constant 0 : index
      %c0_18 = arith.constant 0 : index
      %20 = vector.load %arg7[%c0_17, %c0_18] : memref<16x128xf32, #tpu.memory_space<vmem>>, vector<16x128xf32>
      tpu.vector_store %arg7[%c0_17, %c0_18], %19 {strides = array<i32>} : memref<16x128xf32, #tpu.memory_space<vmem>>, vector<16x128xf32>,
    } else {
    }
    %c0 = arith.constant 0 : index
    %c0_1 = arith.constant 0 : index
    %3 = vector.load %arg2[%c0, %c0_1] : memref<16x128xf32, #tpu.memory_space<vmem>>, vector<16x128xf32>
    %c0_2 = arith.constant 0 : index
    %c0_3 = arith.constant 0 : index
    %4 = vector.load %arg3[%c0_2, %c0_3] : memref<128x128xf32, #tpu.memory_space<vmem>>, vector<128x128xf32>
    %cst = arith.constant dense<0.000000e+00> : vector<16x128xf32>
    %5 = tpu.matmul %3, %4, %cst {dimension_numbers = #tpu.dot_dimension_numbers<[1], [0], [0], [1], [0, 0, 1, 1], [], []>} : vector<16x128xf32>, vector<128x128xf32>, vector<16x128xf32> -> vector<16x128xf32>
    %c0_4 = arith.constant 0 : index
    %c0_5 = arith.constant 0 : index
    %6 = vector.load %arg4[%c0_4, %c0_5] : memref<1x128xf32, #tpu.memory_space<vmem>>, vector<1x128xf32>
    %7 = vector.broadcast %6 : vector<1x128xf32> to vector<16x128xf32>
    %8 = arith.addf %5, %7 : vector<16x128xf32>
    %cst_6 = arith.constant 0.000000e+00 : f32
    %9 = vector.broadcast %cst_6 : f32 to vector<16x128xf32>
    %10 = arith.maximumf %8, %9 : vector<16x128xf32>
    %c0_7 = arith.constant 0 : index
    %c0_8 = arith.constant 0 : index
    %11 = vector.load %arg7[%c0_7, %c0_8] : memref<16x128xf32, #tpu.memory_space<vmem>>, vector<16x128xf32>
    %c0_9 = arith.constant 0 : index
    %c0_10 = arith.constant 0 : index
    %12 = vector.load %arg5[%c0_9, %c0_10] : memref<128x128xf32, #tpu.memory_space<vmem>>, vector<128x128xf32>
    %cst_11 = arith.constant dense<0.000000e+00> : vector<16x128xf32>
    %13 = tpu.matmul %10, %12, %cst_11 {dimension_numbers = #tpu.dot_dimension_numbers<[1], [0], [0], [1], [0, 0, 1, 1], [], []>} : vector<16x128xf32>, vector<128x128xf32>, vector<16x128xf32> -> vector<16x128xf32>
    %14 = arith.addf %11, %13 : vector<16x128xf32>
    %c0_12 = arith.constant 0 : index
    %c0_13 = arith.constant 0 : index
    %15 = vector.load %arg7[%c0_12, %c0_13] : memref<16x128xf32, #tpu.memory_space<vmem>>, vector<16x128xf32>
    tpu.vector_store %arg7[%c0_12, %c0_13], %14 {strides = array<i32>} : memref<16x128xf32, #tpu.memory_space<vmem>>, vector<16x128xf32>,
    %c0_i32_14 = arith.constant 0 : i32
    %16 = arith.cmpi eq, %arg1, %c0_i32_14 : i32
    %17 = arith.extui %16 : i1 to i32
    %c0_i32_15 = arith.constant 0 : i32
    %18 = arith.cmpi ne, %17, %c0_i32_15 : i32
    scf.if %18 {
      %c0_16 = arith.constant 0 : index
      %c0_17 = arith.constant 0 : index
      %19 = vector.load %arg7[%c0_16, %c0_17] : memref<16x128xf32, #tpu.memory_space<vmem>>, vector<16x128xf32>
      %c0_18 = arith.constant 0 : index
      %c0_19 = arith.constant 0 : index
      %20 = vector.load %arg6[%c0_18, %c0_19] : memref<1x128xf32, #tpu.memory_space<vmem>>, vector<1x128xf32>
      %21 = vector.broadcast %20 : vector<1x128xf32> to vector<16x128xf32>
      %22 = arith.addf %19, %21 : vector<16x128xf32>
      %c0_20 = arith.constant 0 : index
      %c0_21 = arith.constant 0 : index
      %23 = vector.load %arg7[%c0_20, %c0_21] : memref<16x128xf32, #tpu.memory_space<vmem>>, vector<16x128xf32>
      tpu.vector_store %arg7[%c0_20, %c0_21], %22 {strides = array<i32>} : memref<16x128xf32, #tpu.memory_space<vmem>>, vector<16x128xf32>,
    } else {
    }
    return
  }
  func.func @transform_0(%arg0: i32, %arg1: i32) -> (i32, i32) {
    %c0_i32 = arith.constant 0 : i32
    %c0_i32_0 = arith.constant 0 : i32
    return %arg0, %c0_i32 : i32, i32
  }
  func.func @transform_1(%arg0: i32, %arg1: i32) -> (i32, i32) {
    %c0_i32 = arith.constant 0 : i32
    %c0_i32_0 = arith.constant 0 : i32
    return %c0_i32, %arg1 : i32, i32
  }
  func.func @transform_2(%arg0: i32, %arg1: i32) -> (i32, i32) {
    %c0_i32 = arith.constant 0 : i32
    %c0_i32_0 = arith.constant 0 : i32
    return %c0_i32, %arg1 : i32, i32
  }
  func.func @transform_3(%arg0: i32, %arg1: i32) -> (i32, i32) {
    %c0_i32 = arith.constant 0 : i32
    %c0_i32_0 = arith.constant 0 : i32
    return %arg1, %c0_i32 : i32, i32
  }
  func.func @transform_4(%arg0: i32, %arg1: i32) -> (i32, i32) {
    %c0_i32 = arith.constant 0 : i32
    %c0_i32_0 = arith.constant 0 : i32
    %c0_i32_1 = arith.constant 0 : i32
    return %c0_i32, %c0_i32_0 : i32, i32
  }
  func.func @transform_5(%arg0: i32, %arg1: i32) -> (i32, i32) {
    %c0_i32 = arith.constant 0 : i32
    %c0_i32_0 = arith.constant 0 : i32
    return %arg0, %c0_i32 : i32, i32
  }
}

</mosaic_0001>

<llo_original>
// kernel: feed_forward_layer.1
$region0: #{feed_forward_layer.1}
  #allocation0 [shape = 'u32[]', space=smem, size = 0x4, offset = 0x4, fixed_abs, tag = 'smem constant byte address 0x4 - core index']
  #allocation1 [shape = 'u32[144,128]{1,0:T(1,128)}', space=vmem, size = 0x12000, scoped, tag = 'internal scratch']
  %s0 = inlined_call_operand.vmem [shape: f32[16,128], index: 0, kind: input, shape index: {}]
  %s1 = inlined_call_operand.vmem [shape: f32[128,128], index: 1, kind: input, shape index: {}]
  %s2 = inlined_call_operand.vmem [shape: f32[1,128], index: 2, kind: input, shape index: {}]
  %s3 = inlined_call_operand.vmem [shape: f32[128,128], index: 3, kind: input, shape index: {}]
  %s4 = inlined_call_operand.vmem [shape: f32[1,128], index: 4, kind: input, shape index: {}]
  %s5 = inlined_call_operand.vmem [shape: f32[16,128], index: 5, kind: output, shape index: {}]
  %s6 = sld [smem:[#allocation0]]
  $region38: #{feed_forward_layer.1} parent=0
    _
  %s8 = ssub.s32 1, %s6
  %s9 = scalar_select 0, %s8, %s6
  // Predicated region
  $region2: #{feed_forward_layer.1} parent=0 // pred_check
    _
  $region3: #{feed_forward_layer.1} parent=0 // pred_check_branch
    %11 = sbr.rel (0) target = $region5
  $region4: #{feed_forward_layer.1} parent=0 // pred_region
    _
  $region5: #{feed_forward_layer.1} parent=0 // pred_fallthru
    _
  // Predicated region
  $region6: #{feed_forward_layer.1} parent=0 // pred_check
    _
  $region7: #{feed_forward_layer.1} parent=0 // pred_check_branch
    %13 = sbr.rel (0) target = $region9
  $region8: #{feed_forward_layer.1} parent=0 // pred_region
    _
  $region9: #{feed_forward_layer.1} parent=0 // pred_fallthru
    _
  // Predicated region
  $region10: #{feed_forward_layer.1} parent=0 // pred_check
    _
  $region11: #{feed_forward_layer.1} parent=0 // pred_check_branch
    %15 = sbr.rel (0) target = $region13
  $region12: #{feed_forward_layer.1} parent=0 // pred_region
    _
  $region13: #{feed_forward_layer.1} parent=0 // pred_fallthru
    _
  // Predicated region
  $region14: #{feed_forward_layer.1} parent=0 // pred_check
    _
  $region15: #{feed_forward_layer.1} parent=0 // pred_check_branch
    %17 = sbr.rel (0) target = $region17
  $region16: #{feed_forward_layer.1} parent=0 // pred_region
    _
  $region17: #{feed_forward_layer.1} parent=0 // pred_fallthru
    _
  // Predicated region
  $region18: #{feed_forward_layer.1} parent=0 // pred_check
    _
  $region19: #{feed_forward_layer.1} parent=0 // pred_check_branch
    %19 = sbr.rel (0) target = $region21
  $region20: #{feed_forward_layer.1} parent=0 // pred_region
    _
  $region21: #{feed_forward_layer.1} parent=0 // pred_fallthru
    _
  %p20 = scmp.eq.s32.totalorder 0, 0
  // Predicated region
  $region22: #{feed_forward_layer.1} parent=0 // pred_check
    %p21 = pneg %p20
  $region23: #{feed_forward_layer.1} parent=0 // pred_check_branch
    %23 = sbr.rel (%p21) target = $region25
  $region24: #{feed_forward_layer.1} parent=0 // pred_region
    %24 = vst [vmem:[%s5] sm:$0xff] 0.0
    %25 = vst [vmem:[%s5 + $0x8] sm:$0xff] 0.0
  $region25: #{feed_forward_layer.1} parent=0 // pred_fallthru
    _
  %v26 = vld [vmem:[%s0] sm:$0xff]
  %v27 = vld [vmem:[%s0 + $0x8] sm:$0xff]
  %v28 = vld [vmem:[%s1] sm:$0xff]
  %v29 = vld [vmem:[%s1 + $0x8] sm:$0xff]
  %v30 = vld [vmem:[%s1 + $0x10] sm:$0xff]
  %v31 = vld [vmem:[%s1 + $0x18] sm:$0xff]
  %v32 = vld [vmem:[%s1 + $0x20] sm:$0xff]
  %v33 = vld [vmem:[%s1 + $0x28] sm:$0xff]
  %v34 = vld [vmem:[%s1 + $0x30] sm:$0xff]
  %v35 = vld [vmem:[%s1 + $0x38] sm:$0xff]
  %v36 = vld [vmem:[%s1 + $0x40] sm:$0xff]
  %v37 = vld [vmem:[%s1 + $0x48] sm:$0xff]
  %v38 = vld [vmem:[%s1 + $0x50] sm:$0xff]
  %v39 = vld [vmem:[%s1 + $0x58] sm:$0xff]
  %v40 = vld [vmem:[%s1 + $0x60] sm:$0xff]
  %v41 = vld [vmem:[%s1 + $0x68] sm:$0xff]
  %v42 = vld [vmem:[%s1 + $0x70] sm:$0xff]
  %v43 = vld [vmem:[%s1 + $0x78] sm:$0xff]
  %v44 = vld [vmem:[%s2] sm:$0x1]
  %v46 = vlaneseq
  %v47 = vshrl.u32 %v46, 7
  %v48 = vsub.s32 0, %v47
  %v49 = vrot.slane %v44, %v48
  %51 = vmatprep.subr.mxu0 0.0
  %52 = vmatpush1.msra.mxu0 %v43
  %53 = vmatprep.subr.mxu0 0.0
  %54 = vmatpush1.msra.mxu0 %v42
  %55 = vmatprep.subr.mxu0 0.0
  %56 = vmatpush1.msra.mxu0 %v41
  %57 = vmatprep.subr.mxu0 0.0
  %58 = vmatpush1.msra.mxu0 %v40
  %59 = vmatprep.subr.mxu0 0.0
  %60 = vmatpush1.msra.mxu0 %v39
  %61 = vmatprep.subr.mxu0 0.0
  %62 = vmatpush1.msra.mxu0 %v38
  %63 = vmatprep.subr.mxu0 0.0
  %64 = vmatpush1.msra.mxu0 %v37
  %65 = vmatprep.subr.mxu0 0.0
  %66 = vmatpush1.msra.mxu0 %v36
  %67 = vmatprep.subr.mxu0 0.0
  %68 = vmatpush1.msra.mxu0 %v35
  %69 = vmatprep.subr.mxu0 0.0
  %70 = vmatpush1.msra.mxu0 %v34
  %71 = vmatprep.subr.mxu0 0.0
  %72 = vmatpush1.msra.mxu0 %v33
  %73 = vmatprep.subr.mxu0 0.0
  %74 = vmatpush1.msra.mxu0 %v32
  %75 = vmatprep.subr.mxu0 0.0
  %76 = vmatpush1.msra.mxu0 %v31
  %77 = vmatprep.subr.mxu0 0.0
  %78 = vmatpush1.msra.mxu0 %v30
  %79 = vmatprep.subr.mxu0 0.0
  %80 = vmatpush1.msra.mxu0 %v29
  %81 = vmatprep.subr.mxu0 0.0
  %82 = vmatpush1.msra.mxu0 %v28
  %83 = vmatprep.subr.mxu0 0.0
  %84 = vmatpush2.msra.mxu0 0.0
  %85 = vmatprep.subr.mxu0 0.0
  %86 = vmatpush2.msra.mxu0 0.0
  %87 = vmatprep.subr.mxu0 0.0
  %88 = vmatpush2.msra.mxu0 0.0
  %89 = vmatprep.subr.mxu0 0.0
  %90 = vmatpush2.msra.mxu0 0.0
  %91 = vmatprep.subr.mxu0 0.0
  %92 = vmatpush2.msra.mxu0 0.0
  %93 = vmatprep.subr.mxu0 0.0
  %94 = vmatpush2.msra.mxu0 0.0
  %95 = vmatprep.subr.mxu0 0.0
  %96 = vmatpush2.msra.mxu0 0.0
  %97 = vmatprep.subr.mxu0 0.0
  %98 = vmatpush2.msra.mxu0 0.0
  %99 = vmatprep.subr.mxu0 0.0
  %100 = vmatpush2.msra.mxu0 0.0
  %101 = vmatprep.subr.mxu0 0.0
  %102 = vmatpush2.msra.mxu0 0.0
  %103 = vmatprep.subr.mxu0 0.0
  %104 = vmatpush2.msra.mxu0 0.0
  %105 = vmatprep.subr.mxu0 0.0
  %106 = vmatpush2.msra.mxu0 0.0
  %107 = vmatprep.subr.mxu0 0.0
  %108 = vmatpush2.msra.mxu0 0.0
  %109 = vmatprep.subr.mxu0 0.0
  %110 = vmatpush2.msra.mxu0 0.0
  %111 = vmatprep.subr.mxu0 0.0
  %112 = vmatpush2.msra.mxu0 0.0
  %113 = vmatprep.subr.mxu0 0.0
  %114 = vmatpush2.msra.mxu0 0.0
  %115 = vmatprep.mubr.f32.mxu0 0.0
  %116 = vmatmul.mubr.f32.gmra.mxu0 %v26
  %v117 = vpop.f32.mrf.mxu0
  %v118 = vadd.f32 %v49, %v117
  %v119 = vpop.f32.mrf.mxu0
  %120 = vmatprep.mubr.f32.mxu0 0.0
  %121 = vmatmul.mubr.f32.gmra.mxu0 %v27
  %v122 = vpop.f32.mrf.mxu0
  %v123 = vadd.f32 %v49, %v122
  %v124 = vpop.f32.mrf.mxu0
  %125 = vdwg.mxu0
  %v126 = vmax.f32 %v118, 0.0
  %v127 = vmax.f32 %v123, 0.0
  %v128 = vld [vmem:[%s5] sm:$0xff]
  %v129 = vld [vmem:[%s5 + $0x8] sm:$0xff]
  %v130 = vld [vmem:[%s3] sm:$0xff]
  %v131 = vld [vmem:[%s3 + $0x8] sm:$0xff]
  %v132 = vld [vmem:[%s3 + $0x10] sm:$0xff]
  %v133 = vld [vmem:[%s3 + $0x18] sm:$0xff]
  %v134 = vld [vmem:[%s3 + $0x20] sm:$0xff]
  %v135 = vld [vmem:[%s3 + $0x28] sm:$0xff]
  %v136 = vld [vmem:[%s3 + $0x30] sm:$0xff]
  %v137 = vld [vmem:[%s3 + $0x38] sm:$0xff]
  %v138 = vld [vmem:[%s3 + $0x40] sm:$0xff]
  %v139 = vld [vmem:[%s3 + $0x48] sm:$0xff]
  %v140 = vld [vmem:[%s3 + $0x50] sm:$0xff]
  %v141 = vld [vmem:[%s3 + $0x58] sm:$0xff]
  %v142 = vld [vmem:[%s3 + $0x60] sm:$0xff]
  %v143 = vld [vmem:[%s3 + $0x68] sm:$0xff]
  %v144 = vld [vmem:[%s3 + $0x70] sm:$0xff]
  %v145 = vld [vmem:[%s3 + $0x78] sm:$0xff]
  %146 = vmatprep.subr.mxu0 0.0
  %147 = vmatpush1.msra.mxu0 %v145
  %148 = vmatprep.subr.mxu0 0.0
  %149 = vmatpush1.msra.mxu0 %v144
  %150 = vmatprep.subr.mxu0 0.0
  %151 = vmatpush1.msra.mxu0 %v143
  %152 = vmatprep.subr.mxu0 0.0
  %153 = vmatpush1.msra.mxu0 %v142
  %154 = vmatprep.subr.mxu0 0.0
  %155 = vmatpush1.msra.mxu0 %v141
  %156 = vmatprep.subr.mxu0 0.0
  %157 = vmatpush1.msra.mxu0 %v140
  %158 = vmatprep.subr.mxu0 0.0
  %159 = vmatpush1.msra.mxu0 %v139
  %160 = vmatprep.subr.mxu0 0.0
  %161 = vmatpush1.msra.mxu0 %v138
  %162 = vmatprep.subr.mxu0 0.0
  %163 = vmatpush1.msra.mxu0 %v137
  %164 = vmatprep.subr.mxu0 0.0
  %165 = vmatpush1.msra.mxu0 %v136
  %166 = vmatprep.subr.mxu0 0.0
  %167 = vmatpush1.msra.mxu0 %v135
  %168 = vmatprep.subr.mxu0 0.0
  %169 = vmatpush1.msra.mxu0 %v134
  %170 = vmatprep.subr.mxu0 0.0
  %171 = vmatpush1.msra.mxu0 %v133
  %172 = vmatprep.subr.mxu0 0.0
  %173 = vmatpush1.msra.mxu0 %v132
  %174 = vmatprep.subr.mxu0 0.0
  %175 = vmatpush1.msra.mxu0 %v131
  %176 = vmatprep.subr.mxu0 0.0
  %177 = vmatpush1.msra.mxu0 %v130
  %178 = vmatprep.subr.mxu0 0.0
  %179 = vmatpush2.msra.mxu0 0.0
  %180 = vmatprep.subr.mxu0 0.0
  %181 = vmatpush2.msra.mxu0 0.0
  %182 = vmatprep.subr.mxu0 0.0
  %183 = vmatpush2.msra.mxu0 0.0
  %184 = vmatprep.subr.mxu0 0.0
  %185 = vmatpush2.msra.mxu0 0.0
  %186 = vmatprep.subr.mxu0 0.0
  %187 = vmatpush2.msra.mxu0 0.0
  %188 = vmatprep.subr.mxu0 0.0
  %189 = vmatpush2.msra.mxu0 0.0
  %190 = vmatprep.subr.mxu0 0.0
  %191 = vmatpush2.msra.mxu0 0.0
  %192 = vmatprep.subr.mxu0 0.0
  %193 = vmatpush2.msra.mxu0 0.0
  %194 = vmatprep.subr.mxu0 0.0
  %195 = vmatpush2.msra.mxu0 0.0
  %196 = vmatprep.subr.mxu0 0.0
  %197 = vmatpush2.msra.mxu0 0.0
  %198 = vmatprep.subr.mxu0 0.0
  %199 = vmatpush2.msra.mxu0 0.0
  %200 = vmatprep.subr.mxu0 0.0
  %201 = vmatpush2.msra.mxu0 0.0
  %202 = vmatprep.subr.mxu0 0.0
  %203 = vmatpush2.msra.mxu0 0.0
  %204 = vmatprep.subr.mxu0 0.0
  %205 = vmatpush2.msra.mxu0 0.0
  %206 = vmatprep.subr.mxu0 0.0
  %207 = vmatpush2.msra.mxu0 0.0
  %208 = vmatprep.subr.mxu0 0.0
  %209 = vmatpush2.msra.mxu0 0.0
  %210 = vmatprep.mubr.f32.mxu0 0.0
  %211 = vmatmul.mubr.f32.gmra.mxu0 %v126
  %v212 = vpop.f32.mrf.mxu0
  %v213 = vadd.f32 0.0, %v212
  %v214 = vpop.f32.mrf.mxu0
  %215 = vmatprep.mubr.f32.mxu0 0.0
  %216 = vmatmul.mubr.f32.gmra.mxu0 %v127
  %v217 = vpop.f32.mrf.mxu0
  %v218 = vadd.f32 0.0, %v217
  %v219 = vpop.f32.mrf.mxu0
  %220 = vdwg.mxu0
  %v221 = vadd.f32 %v128, %v213
  %v222 = vadd.f32 %v129, %v218
  %223 = vst [vmem:[%s5] sm:$0xff] %v221
  %224 = vst [vmem:[%s5 + $0x8] sm:$0xff] %v222
  // Predicated region
  $region26: #{feed_forward_layer.1} parent=0 // pred_check
    %p225 = pneg %p20
  $region27: #{feed_forward_layer.1} parent=0 // pred_check_branch
    %227 = sbr.rel (%p225) target = $region29
  $region28: #{feed_forward_layer.1} parent=0 // pred_region
    %v228 = vld [vmem:[%s5] sm:$0xff]
    %v229 = vld [vmem:[%s5 + $0x8] sm:$0xff]
    %v230 = vld [vmem:[%s4] sm:$0x1]
    %v232 = vlaneseq
    %v233 = vshrl.u32 %v232, 7
    %v234 = vsub.s32 0, %v233
    %v235 = vrot.slane %v230, %v234
    %v237 = vadd.f32 %v228, %v235
    %v238 = vadd.f32 %v229, %v235
    %239 = vst [vmem:[%s5] sm:$0xff] %v237
    %240 = vst [vmem:[%s5 + $0x8] sm:$0xff] %v238
  $region29: #{feed_forward_layer.1} parent=0 // pred_fallthru
    _
  // Predicated region
  $region30: #{feed_forward_layer.1} parent=0 // pred_check
    _
  $region31: #{feed_forward_layer.1} parent=0 // pred_check_branch
    %242 = sbr.rel (0) target = $region33
  $region32: #{feed_forward_layer.1} parent=0 // pred_region
    _
  $region33: #{feed_forward_layer.1} parent=0 // pred_fallthru
    _
  // Predicated region
  $region34: #{feed_forward_layer.1} parent=0 // pred_check
    _
  $region35: #{feed_forward_layer.1} parent=0 // pred_check_branch
    %244 = sbr.rel (0) target = $region37
  $region36: #{feed_forward_layer.1} parent=0 // pred_region
    _
  $region37: #{feed_forward_layer.1} parent=0 // pred_fallthru
    _

</llo_original>
